<compile_context>
chip_gen: v5e
topology: v5e:2x2
jax: 0.10.0
libtpu: 0.0.40
codegen_flags: <defaults>
</compile_context>

<pallas_src>
import jax
import jax.numpy as jnp
from jax.experimental import pallas as pl
from jax.experimental.pallas import tpu as pltpu

LANES = 128
ACC_ROWS = 8            # one f32 vreg tile: (8, 128)
MAX_TILE_ROWS = 2048    # (2048, 128) f32 = 1 MiB per input per pipeline buffer


def _gradloss_kernel(fake_ref, real_ref, out_ref, acc_ref):
    i = pl.program_id(1)

    @pl.when(i == 0)
    def _():
        acc_ref[...] = jnp.zeros_like(acc_ref)

    diff = real_ref[...].astype(jnp.float32) - fake_ref[...].astype(jnp.float32)
    # Per-lane/sublane partial sums: pure VPU sub/abs/add every iteration; the
    # expensive cross-lane reduce is deferred to the wrapper (once per call).
    acc_ref[...] += jnp.sum(jnp.abs(diff).reshape(-1, ACC_ROWS, LANES), axis=0)

    @pl.when(i == pl.num_programs(1) - 1)
    def _():
        out_ref[...] = acc_ref[...]


def grad_loss(grad_fake, grad_real, *, max_tile_rows=MAX_TILE_ROWS):
    """Mean absolute error over all elements (PyTorch GradLoss.forward)."""
    assert grad_fake.shape == grad_real.shape
    n_elems = grad_fake.size

    # Keep the original dtype (e.g. bf16): halves HBM traffic vs upcasting in
    # the wrapper; the f32 cast happens per-tile inside the kernel.
    fake_flat = grad_fake.reshape(-1)
    real_flat = grad_real.reshape(-1)

    rows = n_elems // LANES
    lane_main = rows * LANES

    total = jnp.zeros((), jnp.float32)
    main_elems = 0

    if rows >= ACC_ROWS:
        # Largest tile (multiple of 8 rows, capped) and the block-aligned
        # prefix of the data that the Pallas kernel will stream.
        tile_rows = min(max_tile_rows, (rows // ACC_ROWS) * ACC_ROWS)
        n_blocks = rows // tile_rows
        num_parts = 2 if (n_blocks >= 2 and n_blocks % 2 == 0) else 1
        blocks_per_part = n_blocks // num_parts
        main_rows = num_parts * blocks_per_part * tile_rows
        main_elems = main_rows * LANES

        # No jnp.pad: for typical NCHW gradient maps n_elems % 128 == 0, so
        # this slice+reshape is a free view; the kernel simply never reads the
        # (rows % tile_rows) tail rows.
        fake2d = fake_flat[:lane_main].reshape(rows, LANES)
        real2d = real_flat[:lane_main].reshape(rows, LANES)

        itemsize = jnp.dtype(fake2d.dtype).itemsize
        cost = pl.CostEstimate(
            flops=3 * main_elems,
            transcendentals=0,
            bytes_accessed=2 * main_elems * itemsize
            + num_parts * ACC_ROWS * LANES * 4,
        )

        in_map = lambda p, i: (p * blocks_per_part + i, 0)

        partials = pl.pallas_call(
            _gradloss_kernel,
            out_shape=jax.ShapeDtypeStruct(
                (num_parts, ACC_ROWS, LANES), jnp.float32
            ),
            grid_spec=pltpu.PrefetchScalarGridSpec(
                num_scalar_prefetch=0,
                grid=(num_parts, blocks_per_part),
                in_specs=[
                    pl.BlockSpec((tile_rows, LANES), in_map),
                    pl.BlockSpec((tile_rows, LANES), in_map),
                ],
                out_specs=pl.BlockSpec(
                    (None, ACC_ROWS, LANES), lambda p, i: (p, 0, 0)
                ),
                scratch_shapes=[pltpu.VMEM((ACC_ROWS, LANES), jnp.float32)],
            ),
            compiler_params=pltpu.CompilerParams(
                dimension_semantics=("parallel", "arbitrary"),
            ),
            cost_estimate=cost,
        )(fake2d, real2d)

        total = total + jnp.sum(partials)

    if main_elems < n_elems:
        # Tiny tail (< tile_rows*128 elems, or everything if the input is
        # smaller than one vreg row): plain-JAX sum, fuses with the slice.
        tail_fake = fake_flat[main_elems:].astype(jnp.float32)
        tail_real = real_flat[main_elems:].astype(jnp.float32)
        total = total + jnp.sum(jnp.abs(tail_real - tail_fake))

    return total / jnp.float32(n_elems)


def _ref_loss(grad_fake, grad_real):
    f = grad_fake.astype(jnp.float32)
    r = grad_real.astype(jnp.float32)
    return jnp.sum(jnp.mean(jnp.abs(r - f)))


if __name__ == "__main__":
    key = jax.random.PRNGKey(0)
    k1, k2, k3, k4, k5, k6 = jax.random.split(key, 6)

    # 1) Small NCHW gradient maps (single-block kernel path).
    a = jax.random.normal(k1, (2, 4, 16, 16), dtype=jnp.float32)
    b = jax.random.normal(k2, (2, 4, 16, 16), dtype=jnp.float32)
    out = jax.block_until_ready(grad_loss(a, b))
    assert jnp.allclose(out, _ref_loss(a, b), rtol=1e-5, atol=1e-6), out

    # 2) Force the multi-block / 2-part parallel path with a tiny tile cap.
    a2 = jax.random.normal(k3, (2, 4, 16, 32), dtype=jnp.float32)
    b2 = jax.random.normal(k4, (2, 4, 16, 32), dtype=jnp.float32)
    out2 = jax.block_until_ready(grad_loss(a2, b2, max_tile_rows=8))
    assert jnp.allclose(out2, _ref_loss(a2, b2), rtol=1e-5, atol=1e-6), out2

    # 3) Shape not a multiple of 128: exercises the plain-JAX tail path.
    a3 = jax.random.normal(k5, (2, 3, 17, 19), dtype=jnp.float32)
    b3 = jax.random.normal(k6, (2, 3, 17, 19), dtype=jnp.float32)
    out3 = jax.block_until_ready(grad_loss(a3, b3))
    assert jnp.allclose(out3, _ref_loss(a3, b3), rtol=1e-5, atol=1e-6), out3

    # 4) bf16 inputs stream at narrow dtype (cast to f32 inside the kernel).
    a4 = a.astype(jnp.bfloat16)
    b4 = b.astype(jnp.bfloat16)
    out4 = jax.block_until_ready(grad_loss(a4, b4))
    assert jnp.allclose(out4, _ref_loss(a4, b4), rtol=2e-2, atol=1e-3), out4

    print("KERNEL_OK")
</pallas_src>

<mosaic_0001>
module attributes {stable_mosaic.version = 11 : i64} {
  func.func @_gradloss_kernel(%arg0: i32, %arg1: i32, %arg2: memref<16x128xf32, #tpu.memory_space<vmem>>, %arg3: memref<16x128xf32, #tpu.memory_space<vmem>>, %arg4: memref<1x8x128xf32, #tpu.memory_space<vmem>>, %arg5: memref<8x128xf32, #tpu.memory_space<vmem>>) attributes {dimension_semantics = [#tpu.dimension_semantics<parallel>, #tpu.dimension_semantics<arbitrary>], iteration_bounds = array<i64: 1, 1>, scalar_prefetch = 0 : i64, scratch_operands = 1 : i64, tpu.core_type = #tpu.core_type<tc>, window_params = [{transform_indices = @transform_0, window_bounds = array<i64: 16, 128>}, {transform_indices = @transform_1, window_bounds = array<i64: 16, 128>}, {transform_indices = @transform_2, window_bounds = array<i64: 1, 8, 128>}]} {
    %c0_i32 = arith.constant 0 : i32
    %0 = arith.cmpi eq, %arg1, %c0_i32 : i32
    %1 = arith.extui %0 : i1 to i32
    %c0_i32_0 = arith.constant 0 : i32
    %2 = arith.cmpi ne, %1, %c0_i32_0 : i32
    scf.if %2 {
      %cst_10 = arith.constant 0.000000e+00 : f32
      %15 = vector.broadcast %cst_10 : f32 to vector<8x128xf32>
      %c0_11 = arith.constant 0 : index
      %c0_12 = arith.constant 0 : index
      %16 = vector.load %arg5[%c0_11, %c0_12] : memref<8x128xf32, #tpu.memory_space<vmem>>, vector<8x128xf32>
      tpu.vector_store %arg5[%c0_11, %c0_12], %15 {strides = array<i32>} : memref<8x128xf32, #tpu.memory_space<vmem>>, vector<8x128xf32>,
    } else {
    }
    %c0 = arith.constant 0 : index
    %c0_1 = arith.constant 0 : index
    %3 = vector.load %arg3[%c0, %c0_1] : memref<16x128xf32, #tpu.memory_space<vmem>>, vector<16x128xf32>
    %c0_2 = arith.constant 0 : index
    %c0_3 = arith.constant 0 : index
    %4 = vector.load %arg2[%c0_2, %c0_3] : memref<16x128xf32, #tpu.memory_space<vmem>>, vector<16x128xf32>
    %5 = arith.subf %3, %4 : vector<16x128xf32>
    %c0_4 = arith.constant 0 : index
    %c0_5 = arith.constant 0 : index
    %6 = vector.load %arg5[%c0_4, %c0_5] : memref<8x128xf32, #tpu.memory_space<vmem>>, vector<8x128xf32>
    %7 = math.absf %5 : vector<16x128xf32>
    %8 = vector.shape_cast %7 : vector<16x128xf32> to vector<2x8x128xf32>
    %cst = arith.constant dense<0.000000e+00> : vector<8x128xf32>
    %9 = vector.multi_reduction <add>, %8, %cst [0] : vector<2x8x128xf32> to vector<8x128xf32>
    %10 = arith.addf %6, %9 : vector<8x128xf32>
    %c0_6 = arith.constant 0 : index
    %c0_7 = arith.constant 0 : index
    %11 = vector.load %arg5[%c0_6, %c0_7] : memref<8x128xf32, #tpu.memory_space<vmem>>, vector<8x128xf32>
    tpu.vector_store %arg5[%c0_6, %c0_7], %10 {strides = array<i32>} : memref<8x128xf32, #tpu.memory_space<vmem>>, vector<8x128xf32>,
    %c0_i32_8 = arith.constant 0 : i32
    %12 = arith.cmpi eq, %arg1, %c0_i32_8 : i32
    %13 = arith.extui %12 : i1 to i32
    %c0_i32_9 = arith.constant 0 : i32
    %14 = arith.cmpi ne, %13, %c0_i32_9 : i32
    scf.if %14 {
      %c0_10 = arith.constant 0 : index
      %c0_11 = arith.constant 0 : index
      %15 = vector.load %arg5[%c0_10, %c0_11] : memref<8x128xf32, #tpu.memory_space<vmem>>, vector<8x128xf32>
      %c0_12 = arith.constant 0 : index
      %c0_13 = arith.constant 0 : index
      %c0_14 = arith.constant 0 : index
      %16 = vector.load %arg4[%c0_12, %c0_13, %c0_14] : memref<1x8x128xf32, #tpu.memory_space<vmem>>, vector<1x8x128xf32>
      %17 = vector.shape_cast %16 : vector<1x8x128xf32> to vector<8x128xf32>
      %18 = vector.shape_cast %15 : vector<8x128xf32> to vector<1x8x128xf32>
      tpu.vector_store %arg4[%c0_12, %c0_13, %c0_14], %18 {strides = array<i32>} : memref<1x8x128xf32, #tpu.memory_space<vmem>>, vector<1x8x128xf32>,
    } else {
    }
    return
  }
  func.func @transform_0(%arg0: i32, %arg1: i32) -> (i32, i32) {
    %c1_i32 = arith.constant 1 : i32
    %0 = arith.muli %arg0, %c1_i32 : i32
    %1 = arith.addi %0, %arg1 : i32
    %c0_i32 = arith.constant 0 : i32
    %c0_i32_0 = arith.constant 0 : i32
    return %1, %c0_i32 : i32, i32
  }
  func.func @transform_1(%arg0: i32, %arg1: i32) -> (i32, i32) {
    %c1_i32 = arith.constant 1 : i32
    %0 = arith.muli %arg0, %c1_i32 : i32
    %1 = arith.addi %0, %arg1 : i32
    %c0_i32 = arith.constant 0 : i32
    %c0_i32_0 = arith.constant 0 : i32
    return %1, %c0_i32 : i32, i32
  }
  func.func @transform_2(%arg0: i32, %arg1: i32) -> (i32, i32, i32) {
    %c0_i32 = arith.constant 0 : i32
    %c0_i32_0 = arith.constant 0 : i32
    %c0_i32_1 = arith.constant 0 : i32
    return %arg0, %c0_i32, %c0_i32_0 : i32, i32, i32
  }
}

</mosaic_0001>

<llo_original>
// kernel: tpu_custom_call.1
$region0: #{tpu_custom_call.1}
  #allocation0 [shape = 'u32[]', space=smem, size = 0x4, offset = 0x4, fixed_abs, tag = 'smem constant byte address 0x4 - core index']
  #allocation1 [shape = 'u32[72,128]{1,0:T(1,128)}', space=vmem, size = 0x9000, scoped, tag = 'internal scratch']
  #allocation2 [shape = 'f32[8,128]{1,0:T(8,128)}', space=vmem, size = 0x1000, scoped, tag = 'scratch operand']
  %s0 = inlined_call_operand.hbm [shape: f32[16,128], index: 0, kind: input, shape index: {}]
  %s1 = inlined_call_operand.hbm [shape: f32[16,128], index: 1, kind: input, shape index: {}]
  %s2 = inlined_call_operand.hbm [shape: f32[1,8,128], index: 2, kind: output, shape index: {}]
  %s3 = sld [smem:[#allocation0]]
  $region34: #{tpu_custom_call.1} parent=0
    _
  %s5 = ssub.s32 1, %s3
  %s6 = scalar_select 0, %s5, %s3
  $region1: #{tpu_custom_call.1} parent=0
    #allocation3 [shape = 'u8[8192]{0}', space=vmem, size = 0x2000, scoped, tag = 'input window, operand 0, single buffered']
    #allocation4 [shape = 's32[1]{0}', space=sflag, size = 0x4, scoped, tag = 'scoped memory for tpu_custom_call.1']
    #allocation5 [shape = 's32[1]{0}', space=sflag, size = 0x4, scoped, tag = 'scoped memory for tpu_custom_call.1']
    #allocation6 [shape = 'u8[8192]{0}', space=vmem, size = 0x2000, scoped, tag = 'input window, operand 1, single buffered']
    #allocation7 [shape = 's32[1]{0}', space=sflag, size = 0x4, scoped, tag = 'scoped memory for tpu_custom_call.1']
    #allocation8 [shape = 'u8[4096]{0}', space=vmem, size = 0x1000, scoped, tag = 'output window, operand 0, single buffered']
    %7 = vsyncpa [#allocation4], 0
    %8 = vsyncpa [#allocation7], 0
    %9 = vsyncpa [#allocation5], 0
    // Predicated region
    $region2: #{tpu_custom_call.1} parent=1 // pred_check
      _
    $region3: #{tpu_custom_call.1} parent=1 // pred_check_branch
      %11 = sbr.rel (0) target = $region5
    $region4: #{tpu_custom_call.1} parent=1 // pred_region
      %s12 = sadd.s32 0, 0
      %s13 = smul.u32 2, %s12
      %15 = vsyncadd [#allocation4], 0
      %s16 = smul.addr %s13, 8
      %s17 = scalar_lea.hbm %s0, %s16
      %s18 = sshll.u32 %s17, 4
      %s19 = int_to_ptr.hbm [resolvable:$true] %s18
      %s20 = sshll.u32 [#allocation3], 4
      %s21 = int_to_ptr.vmem [resolvable:$true] %s20
      %26 = dma.hbm_to_vmem [thread:$0]  %s19, 256, %s21, [#allocation4], 128, 128, 8
    $region5: #{tpu_custom_call.1} parent=1 // pred_fallthru
      _
    // Predicated region
    $region6: #{tpu_custom_call.1} parent=1 // pred_check
      _
    $region7: #{tpu_custom_call.1} parent=1 // pred_check_branch
      %28 = sbr.rel (0) target = $region9
    $region8: #{tpu_custom_call.1} parent=1 // pred_region
      %s29 = sadd.s32 0, 0
      %s30 = smul.u32 2, %s29
      %32 = vsyncadd [#allocation7], 0
      %s33 = smul.addr %s30, 8
      %s34 = scalar_lea.hbm %s1, %s33
      %s35 = sshll.u32 %s34, 4
      %s36 = int_to_ptr.hbm [resolvable:$true] %s35
      %s37 = sshll.u32 [#allocation6], 4
      %s38 = int_to_ptr.vmem [resolvable:$true] %s37
      %43 = dma.hbm_to_vmem [thread:$0]  %s36, 256, %s38, [#allocation7], 128, 128, 8
    $region9: #{tpu_custom_call.1} parent=1 // pred_fallthru
      _
    // Predicated region
    $region10: #{tpu_custom_call.1} parent=1 // pred_check
      _
    $region11: #{tpu_custom_call.1} parent=1 // pred_check_branch
      %45 = sbr.rel (0) target = $region13
    $region12: #{tpu_custom_call.1} parent=1 // pred_region
      %47 = dma.done [#allocation4], 256
    $region13: #{tpu_custom_call.1} parent=1 // pred_fallthru
      _
    // Predicated region
    $region14: #{tpu_custom_call.1} parent=1 // pred_check
      _
    $region15: #{tpu_custom_call.1} parent=1 // pred_check_branch
      %49 = sbr.rel (0) target = $region17
    $region16: #{tpu_custom_call.1} parent=1 // pred_region
      %51 = dma.done [#allocation7], 256
    $region17: #{tpu_custom_call.1} parent=1 // pred_fallthru
      _
    %s52 = sadd.s32 0, 0
    %s53 = smul.u32 2, %s52
    %s54 = sadd.s32 0, 0
    %s55 = smul.u32 2, %s54
    %p56 = scmp.eq.s32.totalorder 0, 0
    // Predicated region
    $region18: #{tpu_custom_call.1} parent=1 // pred_check
      %p57 = pneg %p56
    $region19: #{tpu_custom_call.1} parent=1 // pred_check_branch
      %59 = sbr.rel (%p57) target = $region21
    $region20: #{tpu_custom_call.1} parent=1 // pred_region
      %60 = vst [vmem:[#allocation2] sm:$0xff] 0.0
    $region21: #{tpu_custom_call.1} parent=1 // pred_fallthru
      _
    %v61 = vld [vmem:[#allocation6] sm:$0xff]
    %v62 = vld [vmem:[#allocation6 + $0x8] sm:$0xff]
    %v63 = vld [vmem:[#allocation3] sm:$0xff]
    %v64 = vld [vmem:[#allocation3 + $0x8] sm:$0xff]
    %v65 = vsub.f32 %v61, %v63
    %v66 = vsub.f32 %v62, %v64
    %v67 = vld [vmem:[#allocation2] sm:$0xff]
    %v68 = vand.u32 2147483647, %v65
    %v69 = vand.u32 2147483647, %v66
    %v70 = vadd.f32 %v68, %v69
    %v71 = vadd.f32 %v67, %v70
    %72 = vst [vmem:[#allocation2] sm:$0xff] %v71
    // Predicated region
    $region22: #{tpu_custom_call.1} parent=1 // pred_check
      %p73 = pneg %p56
    $region23: #{tpu_custom_call.1} parent=1 // pred_check_branch
      %75 = sbr.rel (%p73) target = $region25
    $region24: #{tpu_custom_call.1} parent=1 // pred_region
      %v76 = vld [vmem:[#allocation2] sm:$0xff]
      %77 = vst [vmem:[#allocation8] sm:$0xff] %v76
    $region25: #{tpu_custom_call.1} parent=1 // pred_fallthru
      _
    // Predicated region
    $region26: #{tpu_custom_call.1} parent=1 // pred_check
      _
    $region27: #{tpu_custom_call.1} parent=1 // pred_check_branch
      %79 = sbr.rel (0) target = $region29
    $region28: #{tpu_custom_call.1} parent=1 // pred_region
      %81 = vsyncadd [#allocation5], 0
      %s83 = sshll.u32 [#allocation8], 4
      %s84 = int_to_ptr.vmem [resolvable:$true] %s83
      %s85 = sshll.u32 %s2, 4
      %s86 = int_to_ptr.hbm [resolvable:$true] %s85
      %88 = dma.vmem_to_hbm [thread:$0]  %s84, 128, %s86, [#allocation5]
    $region29: #{tpu_custom_call.1} parent=1 // pred_fallthru
      _
    // Predicated region
    $region30: #{tpu_custom_call.1} parent=1 // pred_check
      _
    $region31: #{tpu_custom_call.1} parent=1 // pred_check_branch
      %90 = sbr.rel (0) target = $region33
    $region32: #{tpu_custom_call.1} parent=1 // pred_region
      %92 = dma.done [#allocation5], 128
    $region33: #{tpu_custom_call.1} parent=1 // pred_fallthru
      _
    %93 = vsyncpa [#allocation4], 1
    %94 = vsyncpa [#allocation7], 1
    %95 = vsyncpa [#allocation5], 1

</llo_original>
